<compile_context>
chip_gen: v7x
topology: tpu7x:2x2x1
jax: 0.10.0
libtpu: 0.0.40
codegen_flags: <defaults>
</compile_context>

<pallas_src>
import math

import jax
import jax.numpy as jnp
from jax.experimental import pallas as pl
from jax.experimental.pallas import tpu as pltpu


_LANES = 128
_MIN_GRID_STEPS = 8               # keep enough steps to shard across v7x's 2 TCs
_MIB = 1024 * 1024


def _denoise_kernel(x_ref, thr_ref, o_ref):
    x = x_ref[...]                                   # (tile_r, d_eff), x dtype
    thr = thr_ref[...]                               # (1, d_eff), float32, broadcasts over rows
    keep = jnp.abs(x.astype(jnp.float32)) > thr      # compare in f32 (PyTorch promotion)
    o_ref[...] = jnp.where(keep, x, jnp.zeros_like(x))


def _fold_factor(d):
    """Smallest f such that f*d is a multiple of 128 (=> lane-dense blocks)."""
    return _LANES // math.gcd(d, _LANES)


def _vmem_capacity_bytes():
    """Physical VMEM per core, with a conservative fallback (v7x per-TC)."""
    try:
        cap = getattr(pltpu.get_tpu_info(), "vmem_capacity_bytes", None)
        if cap:
            return int(cap)
    except Exception:
        pass
    return 64 * _MIB


def dynamic_threshold_denoising(x, threshold, *, min_pallas_elems=1 << 15):
    """x: [..., D] array, threshold: [D] parameter."""
    orig_shape = x.shape
    d = orig_shape[-1]
    assert threshold.shape == (d,)
    thr_f32 = threshold.astype(jnp.float32)

    # Tiny inputs: fixed pallas_call launch/per-step overhead dwarfs the work;
    # let XLA fuse a plain where() instead.
    if x.size <= min_pallas_elems:
        return jnp.where(jnp.abs(x.astype(jnp.float32)) > thr_f32,
                         x, jnp.zeros_like(x))

    x2d = x.reshape(-1, d)                           # (R, D)
    rows = x2d.shape[0]

    # Lane-density: fold rows into the lane dim so the kernel's last dim is a
    # multiple of 128.  Pad with zero rows (sliced off afterwards) so the fold
    # never disengages; padded zeros map to zeros under the op, so harmless.
    f = _fold_factor(d)
    pad_rows = (-rows) % f
    if pad_rows:
        x2d = jnp.pad(x2d, ((0, pad_rows), (0, 0)))
    rows_p = rows + pad_rows
    rows_eff, d_eff = rows_p // f, d * f             # d_eff always a multiple of 128
    x_eff = x2d.reshape(rows_eff, d_eff)
    thr_eff = jnp.tile(thr_f32, f).reshape(1, d_eff)

    # dtype-specific sublane multiple: 8 (f32) / 16 (bf16) / 32 (int8, fp8).
    itemsize = x_eff.dtype.itemsize
    sub = max(8, 32 // max(1, itemsize))

    # Generation-aware per-buffer byte budget.
    vmem_cap = _vmem_capacity_bytes()
    budget = 8 * _MIB if vmem_cap >= 96 * _MIB else 4 * _MIB

    # Row-tile sizing: byte budget binds; keep the grid >= _MIN_GRID_STEPS when
    # the row count allows; round to the sublane multiple (ragged last tile is
    # handled by Pallas).
    bytes_per_row = d_eff * itemsize
    tile_r = min(rows_eff, max(1, budget // bytes_per_row))
    if rows_eff > _MIN_GRID_STEPS * sub:
        tile_r = min(tile_r, max(sub, -(-rows_eff // _MIN_GRID_STEPS)))
    if tile_r < rows_eff:
        tile_r = max(sub, (tile_r // sub) * sub)
    grid = (pl.cdiv(rows_eff, tile_r),)

    # VMEM footprint: (in + out) x 2 double buffers x block, plus the resident
    # threshold.  Limit ~2x footprint, clamped below physical capacity.
    footprint = 4 * tile_r * bytes_per_row + 2 * d_eff * 4
    vmem_limit = int(min(max(2 * footprint, 16 * _MIB), vmem_cap - 8 * _MIB))

    out = pl.pallas_call(
        _denoise_kernel,
        out_shape=jax.ShapeDtypeStruct((rows_eff, d_eff), x_eff.dtype),
        grid_spec=pl.GridSpec(
            grid=grid,
            in_specs=[
                pl.BlockSpec((tile_r, d_eff), lambda i: (i, 0)),  # row-tiled x
                pl.BlockSpec((1, d_eff), lambda i: (0, 0)),       # resident threshold
            ],
            out_specs=pl.BlockSpec((tile_r, d_eff), lambda i: (i, 0)),
        ),
        compiler_params=pltpu.CompilerParams(
            # "parallel" lets the compiler shard rows over v7x's 2 TCs; switch
            # to pltpu.CORE_PARALLEL only if a profile shows one TC idle.
            dimension_semantics=("parallel",),
            vmem_limit_bytes=vmem_limit,
        ),
    )(x_eff, thr_eff)

    out2d = out.reshape(rows_p, d)
    if pad_rows:
        out2d = out2d[:rows]
    return out2d.reshape(orig_shape)


if __name__ == "__main__":
    key = jax.random.PRNGKey(0)
    k1, k2, k3 = jax.random.split(key, 3)

    def ref_fn(x, thr):
        return jnp.where(jnp.abs(x.astype(jnp.float32)) > thr.astype(jnp.float32),
                         x, jnp.zeros_like(x))

    # 1) Small shape consistent with the module: x = [batch, seq, hidden].
    batch, seq, hidden = 2, 8, 32
    x_small = jax.random.normal(k1, (batch, seq, hidden), dtype=jnp.float32) * 2.0
    thr_small = jnp.ones((hidden,), dtype=jnp.float32)   # nn.Parameter(torch.ones(input_dim))
    out_small = dynamic_threshold_denoising(x_small, thr_small, min_pallas_elems=0)  # force Pallas path
    out_small = jax.block_until_ready(out_small)
    assert out_small.shape == x_small.shape and out_small.dtype == x_small.dtype
    assert jnp.allclose(out_small, ref_fn(x_small, thr_small)), "small-shape mismatch vs reference"

    # 2) Larger shape: row tiling, lane fold (D=32 -> 128) and a ragged last tile.
    b2, s2, h2 = 4, 2050, 32
    x_big = jax.random.normal(k2, (b2, s2, h2), dtype=jnp.float32)
    thr_big = jnp.full((h2,), 0.5, dtype=jnp.float32)
    out_big = jax.block_until_ready(dynamic_threshold_denoising(x_big, thr_big))
    assert jnp.allclose(out_big, ref_fn(x_big, thr_big)), "tiled-shape mismatch vs reference"

    # 3) Row count not divisible by the fold factor: exercises the zero-row pad
    #    + output slice path (rows = 3*337 = 1011, fold factor for D=96 is 4).
    b3, s3, h3 = 3, 337, 96
    x_pad = jax.random.normal(k3, (b3, s3, h3), dtype=jnp.float32)
    thr_pad = jnp.full((h3,), 0.75, dtype=jnp.float32)
    out_pad = jax.block_until_ready(dynamic_threshold_denoising(x_pad, thr_pad))
    assert out_pad.shape == x_pad.shape
    assert jnp.allclose(out_pad, ref_fn(x_pad, thr_pad)), "padded-fold mismatch vs reference"

    print("KERNEL_OK")
</pallas_src>

<mosaic_0001>
module attributes {stable_mosaic.version = 11 : i64} {
  func.func @_denoise_kernel(%arg0: i32, %arg1: memref<4x128xf32, #tpu.memory_space<vmem>>, %arg2: memref<1x128xf32, #tpu.memory_space<vmem>>, %arg3: memref<4x128xf32, #tpu.memory_space<vmem>>) attributes {dimension_semantics = [#tpu.dimension_semantics<parallel>], iteration_bounds = array<i64: 1>, scalar_prefetch = 0 : i64, scratch_operands = 0 : i64, tpu.core_type = #tpu.core_type<tc>, window_params = [{transform_indices = @transform_0, window_bounds = array<i64: 4, 128>}, {pipeline_mode = #tpu.pipeline_mode<synchronous>, transform_indices = @transform_1, window_bounds = array<i64: 1, 128>}, {transform_indices = @transform_2, window_bounds = array<i64: 4, 128>}]} {
    %c0 = arith.constant 0 : index
    %c0_0 = arith.constant 0 : index
    %0 = vector.load %arg1[%c0, %c0_0] : memref<4x128xf32, #tpu.memory_space<vmem>>, vector<4x128xf32>
    %c0_1 = arith.constant 0 : index
    %c0_2 = arith.constant 0 : index
    %1 = vector.load %arg2[%c0_1, %c0_2] : memref<1x128xf32, #tpu.memory_space<vmem>>, vector<1x128xf32>
    %2 = math.absf %0 : vector<4x128xf32>
    %3 = vector.broadcast %1 : vector<1x128xf32> to vector<4x128xf32>
    %4 = arith.cmpf ogt, %2, %3 : vector<4x128xf32>
    %cst = arith.constant 0.000000e+00 : f32
    %5 = vector.broadcast %cst : f32 to vector<4x128xf32>
    %6 = arith.select %4, %0, %5 : vector<4x128xi1>, vector<4x128xf32>
    %c0_3 = arith.constant 0 : index
    %c0_4 = arith.constant 0 : index
    %7 = vector.load %arg3[%c0_3, %c0_4] : memref<4x128xf32, #tpu.memory_space<vmem>>, vector<4x128xf32>
    tpu.vector_store %arg3[%c0_3, %c0_4], %6 {strides = array<i32>} : memref<4x128xf32, #tpu.memory_space<vmem>>, vector<4x128xf32>,
    return
  }
  func.func @transform_0(%arg0: i32) -> (i32, i32) {
    %c0_i32 = arith.constant 0 : i32
    %c0_i32_0 = arith.constant 0 : i32
    return %arg0, %c0_i32 : i32, i32
  }
  func.func @transform_1(%arg0: i32) -> (i32, i32) {
    %c0_i32 = arith.constant 0 : i32
    %c0_i32_0 = arith.constant 0 : i32
    %c0_i32_1 = arith.constant 0 : i32
    return %c0_i32, %c0_i32_0 : i32, i32
  }
  func.func @transform_2(%arg0: i32) -> (i32, i32) {
    %c0_i32 = arith.constant 0 : i32
    %c0_i32_0 = arith.constant 0 : i32
    return %arg0, %c0_i32 : i32, i32
  }
}

</mosaic_0001>

<llo_original>
// kernel: tpu_custom_call.1
$region0: #{tpu_custom_call.1}
  #allocation0 [shape = 'u32[]', space=smem, size = 0x4, offset = 0x4, fixed_abs, tag = 'smem constant byte address 0x4 - core index']
  #allocation1 [shape = 'u32[144,128]{1,0:T(1,128)}', space=vmem, size = 0x12000, scoped, tag = 'internal scratch']
  %s0 = inlined_call_operand.hbm [shape: f32[4,128], index: 0, kind: input, shape index: {}]
  %s1 = inlined_call_operand.vmem [shape: f32[1,128], index: 1, kind: input, shape index: {}]
  %s2 = inlined_call_operand.hbm [shape: f32[4,128], index: 2, kind: output, shape index: {}]
  %s3 = sld [smem:[#allocation0]]
  $region22: #{tpu_custom_call.1} parent=0
    _
  %s5 = ssub.s32 1, %s3
  %s6 = scalar_select 0, %s5, %s3
  $region1: #{tpu_custom_call.1} parent=0
    #allocation2 [shape = 'u8[2048]{0}', space=vmem, size = 0x800, scoped, tag = 'input window, operand 0, single buffered']
    #allocation3 [shape = 's32[1]{0}', space=sflag, size = 0x4, scoped, tag = 'scoped memory for tpu_custom_call.1']
    #allocation4 [shape = 's32[1]{0}', space=sflag, size = 0x4, scoped, tag = 'scoped memory for tpu_custom_call.1']
    #allocation5 [shape = 'u8[2048]{0}', space=vmem, size = 0x800, scoped, tag = 'output window, operand 0, single buffered']
    %7 = vsyncpa [#allocation3], 0
    %8 = vsyncpa [#allocation4], 0
    // Predicated region
    $region2: #{tpu_custom_call.1} parent=1 // pred_check
      _
    $region3: #{tpu_custom_call.1} parent=1 // pred_check_branch
      %10 = sbr.rel (0) target = $region5
    $region4: #{tpu_custom_call.1} parent=1 // pred_region
      %s12 = ssub.s32 64, 64
      %13 = vsyncadd [#allocation3], %s12
      %s15 = sshll.u32 [#allocation2], 4
      %s16 = int_to_ptr.vmem [resolvable:$true] %s15
      %18 = dma.hbm_to_vmem [thread:$0]  %s0, 64, %s16, [#allocation3]
    $region5: #{tpu_custom_call.1} parent=1 // pred_fallthru
      _
    // Predicated region
    $region6: #{tpu_custom_call.1} parent=1 // pred_check
      _
    $region7: #{tpu_custom_call.1} parent=1 // pred_check_branch
      %20 = sbr.rel (0) target = $region9
    $region8: #{tpu_custom_call.1} parent=1 // pred_region
      _
    $region9: #{tpu_custom_call.1} parent=1 // pred_fallthru
      _
    // Predicated region
    $region10: #{tpu_custom_call.1} parent=1 // pred_check
      _
    $region11: #{tpu_custom_call.1} parent=1 // pred_check_branch
      %22 = sbr.rel (0) target = $region13
    $region12: #{tpu_custom_call.1} parent=1 // pred_region
      %23 = dma.done [#allocation3], 64
    $region13: #{tpu_custom_call.1} parent=1 // pred_fallthru
      _
    %v24 = vld [vmem:[#allocation2] sm:$0xf]
    %v25 = vld [vmem:[%s1] sm:$0x1]
    %v26 = vand.u32 2147483647, %v24
    %v28 = vlaneseq
    %v29 = vshrl.u32 %v28, 7
    %v30 = vsub.s32 0, %v29
    %v31 = vrot.slane %v25, %v30
    %vm33 = vcmp.gt.f32.partialorder %v26, %v31
    %v34 = vsel %vm33, %v24, 0.0
    %35 = vst [vmem:[#allocation5] sm:$0xf] %v34
    // Predicated region
    $region14: #{tpu_custom_call.1} parent=1 // pred_check
      _
    $region15: #{tpu_custom_call.1} parent=1 // pred_check_branch
      %37 = sbr.rel (0) target = $region17
    $region16: #{tpu_custom_call.1} parent=1 // pred_region
      %s39 = ssub.s32 64, 64
      %40 = vsyncadd [#allocation4], %s39
      %s42 = sshll.u32 [#allocation5], 4
      %s43 = int_to_ptr.vmem [resolvable:$true] %s42
      %45 = dma.vmem_to_hbm [thread:$0]  %s43, 64, %s2, [#allocation4]
    $region17: #{tpu_custom_call.1} parent=1 // pred_fallthru
      _
    // Predicated region
    $region18: #{tpu_custom_call.1} parent=1 // pred_check
      _
    $region19: #{tpu_custom_call.1} parent=1 // pred_check_branch
      %47 = sbr.rel (0) target = $region21
    $region20: #{tpu_custom_call.1} parent=1 // pred_region
      %48 = dma.done [#allocation4], 64
    $region21: #{tpu_custom_call.1} parent=1 // pred_fallthru
      _
    %49 = vsyncpa [#allocation3], 1
    %50 = vsyncpa [#allocation4], 1

</llo_original>
